<compile_context>
chip_gen: v5e
topology: v5e:2x2
jax: 0.10.0
libtpu: 0.0.40
codegen_flags: <defaults>
</compile_context>

<pallas_src>
import functools

import jax
import jax.numpy as jnp
from jax.experimental import pallas as pl
from jax.experimental.pallas import tpu as pltpu

_LANE = 128
_TILE_BYTES = 4 << 20      # per-array tile: 3 arrays x 2 buffers = 24 MiB pipeline VMEM
_SMALL_BYTES = 256 << 10   # below this, a fused XLA multiply is already at the floor


def _hadamard_kernel(a_ref, b_ref, o_ref):
    # Elementwise multiply on the current (tm, 128) VMEM tile (VPU only).
    o_ref[...] = a_ref[...] * b_ref[...]


def _sublane_rows(dtype) -> int:
    # Native packed tile heights: (8,128) f32, (16,128) bf16/f16, (32,128) 8-bit.
    itemsize = jnp.dtype(dtype).itemsize
    return max(8, 32 // max(1, itemsize))


@functools.lru_cache(maxsize=None)
def _tpu_generation_caps():
    """Best-effort (vmem_limit_bytes, dual_tensorcore) for the local TPU."""
    vmem_limit = 48 << 20   # v5e/v6e: 128 MiB physical VMEM, plenty of headroom
    dual_core = False
    try:
        kind = jax.devices()[0].device_kind.lower()
    except Exception:
        kind = ""
    if "v7" in kind:
        # v7x: only 64 MiB VMEM per TensorCore and 2 TCs/chip -> smaller cap,
        # and shard the grid across both cores for ~2x effective HBM bandwidth.
        vmem_limit = 40 << 20
        dual_core = True
    return vmem_limit, dual_core


def _hadamard_2d(x2, y2, sub):
    """Pallas elementwise multiply on a lane-dense (M, 128) slab (M % sub == 0)."""
    M = x2.shape[0]
    itemsize = jnp.dtype(x2.dtype).itemsize

    # Rows per tile: as many (in multiples of the native sublane granule) as
    # fit the per-array budget.  Small inputs collapse to tm=M, grid=(1,).
    max_rows = max(sub, (_TILE_BYTES // (_LANE * itemsize)) // sub * sub)
    tm = min(M, max_rows)
    grid = (pl.cdiv(M, tm),)

    vmem_limit, dual_core = _tpu_generation_caps()
    if dual_core and grid[0] > 1:
        semantics = (pltpu.CORE_PARALLEL,)   # real dual-TC split on v7x
    else:
        semantics = ("parallel",)            # single-TC chips / single-step grid

    return pl.pallas_call(
        _hadamard_kernel,
        out_shape=jax.ShapeDtypeStruct((M, _LANE), x2.dtype),
        grid=grid,
        in_specs=[
            pl.BlockSpec((tm, _LANE), lambda i: (i, 0)),
            pl.BlockSpec((tm, _LANE), lambda i: (i, 0)),
        ],
        out_specs=pl.BlockSpec((tm, _LANE), lambda i: (i, 0)),
        compiler_params=pltpu.CompilerParams(
            dimension_semantics=semantics,
            vmem_limit_bytes=vmem_limit,
        ),
    )(x2, y2)


def hadamard(x, y, *, force_pallas: bool = False):
    assert x.shape == y.shape and x.dtype == y.dtype
    orig_shape = x.shape
    n = x.size
    if n == 0:
        return x * y

    # Tiny-tensor fast path: dispatch + DMA fixed cost dwarfs the HBM traffic,
    # and a fused XLA multiply can fuse with surrounding ops.
    if not force_pallas and x.nbytes < _SMALL_BYTES:
        return x * y

    sub = _sublane_rows(x.dtype)
    granule = sub * _LANE
    n_main = (n // granule) * granule

    xf = x.reshape(-1)
    yf = y.reshape(-1)
    if n_main == 0:
        # Entire input is smaller than one native tile.
        return x * y

    out_main = _hadamard_2d(
        xf[:n_main].reshape(n_main // _LANE, _LANE),
        yf[:n_main].reshape(n_main // _LANE, _LANE),
        sub,
    ).reshape(-1)

    if n_main == n:
        return out_main.reshape(orig_shape)

    # Misaligned tail (< sub*128 elements): cheap fused XLA multiply.  This
    # avoids the pad-both-inputs + slice-output extra HBM passes entirely.
    out_tail = xf[n_main:] * yf[n_main:]
    return jnp.concatenate([out_main, out_tail]).reshape(orig_shape)


if __name__ == "__main__":
    key = jax.random.PRNGKey(0)
    k1, k2 = jax.random.split(key)
    # Small NCHW shapes consistent with a conv-style network input.
    input1 = jax.random.normal(k1, (2, 4, 16, 16), dtype=jnp.float32)
    input2 = jax.random.normal(k2, (2, 4, 16, 16), dtype=jnp.float32)

    # Force the Pallas path so the kernel itself compiles and runs on TPU
    # (the default wrapper fast-paths tensors this small to fused XLA).
    out = jax.block_until_ready(hadamard(input1, input2, force_pallas=True))
    ref = input1 * input2
    assert out.shape == ref.shape and out.dtype == ref.dtype
    assert jnp.allclose(out, ref, atol=1e-6, rtol=1e-6)

    # Misaligned element count: aligned prefix via Pallas + XLA tail.
    k3, k4 = jax.random.split(k2)
    a = jax.random.normal(k3, (3, 5, 97), dtype=jnp.float32)   # 1455 elements
    b = jax.random.normal(k4, (3, 5, 97), dtype=jnp.float32)
    out2 = jax.block_until_ready(hadamard(a, b, force_pallas=True))
    assert jnp.allclose(out2, a * b, atol=1e-6, rtol=1e-6)

    # Default wrapper (tiny-tensor fast path) stays correct too.
    out3 = jax.block_until_ready(hadamard(input1, input2))
    assert jnp.allclose(out3, ref, atol=1e-6, rtol=1e-6)

    print("KERNEL_OK")
</pallas_src>

<mosaic_0001>
module attributes {stable_mosaic.version = 11 : i64} {
  func.func @_hadamard_kernel(%arg0: i32, %arg1: memref<16x128xf32, #tpu.memory_space<vmem>>, %arg2: memref<16x128xf32, #tpu.memory_space<vmem>>, %arg3: memref<16x128xf32, #tpu.memory_space<vmem>>) attributes {dimension_semantics = [#tpu.dimension_semantics<parallel>], iteration_bounds = array<i64: 1>, scalar_prefetch = 0 : i64, scratch_operands = 0 : i64, tpu.core_type = #tpu.core_type<tc>, window_params = [{transform_indices = @transform_0, window_bounds = array<i64: 16, 128>}, {transform_indices = @transform_1, window_bounds = array<i64: 16, 128>}, {transform_indices = @transform_2, window_bounds = array<i64: 16, 128>}]} {
    %c0 = arith.constant 0 : index
    %c0_0 = arith.constant 0 : index
    %0 = vector.load %arg1[%c0, %c0_0] : memref<16x128xf32, #tpu.memory_space<vmem>>, vector<16x128xf32>
    %c0_1 = arith.constant 0 : index
    %c0_2 = arith.constant 0 : index
    %1 = vector.load %arg2[%c0_1, %c0_2] : memref<16x128xf32, #tpu.memory_space<vmem>>, vector<16x128xf32>
    %2 = arith.mulf %0, %1 : vector<16x128xf32>
    %c0_3 = arith.constant 0 : index
    %c0_4 = arith.constant 0 : index
    %3 = vector.load %arg3[%c0_3, %c0_4] : memref<16x128xf32, #tpu.memory_space<vmem>>, vector<16x128xf32>
    tpu.vector_store %arg3[%c0_3, %c0_4], %2 {strides = array<i32>} : memref<16x128xf32, #tpu.memory_space<vmem>>, vector<16x128xf32>,
    return
  }
  func.func @transform_0(%arg0: i32) -> (i32, i32) {
    %c0_i32 = arith.constant 0 : i32
    %c0_i32_0 = arith.constant 0 : i32
    return %arg0, %c0_i32 : i32, i32
  }
  func.func @transform_1(%arg0: i32) -> (i32, i32) {
    %c0_i32 = arith.constant 0 : i32
    %c0_i32_0 = arith.constant 0 : i32
    return %arg0, %c0_i32 : i32, i32
  }
  func.func @transform_2(%arg0: i32) -> (i32, i32) {
    %c0_i32 = arith.constant 0 : i32
    %c0_i32_0 = arith.constant 0 : i32
    return %arg0, %c0_i32 : i32, i32
  }
}

</mosaic_0001>

<llo_original>
// kernel: tpu_custom_call.1
$region0: #{tpu_custom_call.1}
  #allocation0 [shape = 'u32[]', space=smem, size = 0x4, offset = 0x4, fixed_abs, tag = 'smem constant byte address 0x4 - core index']
  #allocation1 [shape = 'u32[72,128]{1,0:T(1,128)}', space=vmem, size = 0x9000, scoped, tag = 'internal scratch']
  %s0 = inlined_call_operand.hbm [shape: f32[16,128], index: 0, kind: input, shape index: {}]
  %s1 = inlined_call_operand.hbm [shape: f32[16,128], index: 1, kind: input, shape index: {}]
  %s2 = inlined_call_operand.hbm [shape: f32[16,128], index: 2, kind: output, shape index: {}]
  %s3 = sld [smem:[#allocation0]]
  $region26: #{tpu_custom_call.1} parent=0
    _
  %s5 = ssub.s32 1, %s3
  %s6 = scalar_select 0, %s5, %s3
  $region1: #{tpu_custom_call.1} parent=0
    #allocation2 [shape = 'u8[8192]{0}', space=vmem, size = 0x2000, scoped, tag = 'input window, operand 0, single buffered']
    #allocation3 [shape = 's32[1]{0}', space=sflag, size = 0x4, scoped, tag = 'scoped memory for tpu_custom_call.1']
    #allocation4 [shape = 's32[1]{0}', space=sflag, size = 0x4, scoped, tag = 'scoped memory for tpu_custom_call.1']
    #allocation5 [shape = 'u8[8192]{0}', space=vmem, size = 0x2000, scoped, tag = 'input window, operand 1, single buffered']
    #allocation6 [shape = 's32[1]{0}', space=sflag, size = 0x4, scoped, tag = 'scoped memory for tpu_custom_call.1']
    #allocation7 [shape = 'u8[8192]{0}', space=vmem, size = 0x2000, scoped, tag = 'output window, operand 0, single buffered']
    %7 = vsyncpa [#allocation3], 0
    %8 = vsyncpa [#allocation6], 0
    %9 = vsyncpa [#allocation4], 0
    // Predicated region
    $region2: #{tpu_custom_call.1} parent=1 // pred_check
      _
    $region3: #{tpu_custom_call.1} parent=1 // pred_check_branch
      %11 = sbr.rel (0) target = $region5
    $region4: #{tpu_custom_call.1} parent=1 // pred_region
      %13 = vsyncadd [#allocation3], 0
      %s14 = sshll.u32 %s0, 4
      %s15 = int_to_ptr.hbm [resolvable:$true] %s14
      %s16 = sshll.u32 [#allocation2], 4
      %s17 = int_to_ptr.vmem [resolvable:$true] %s16
      %22 = dma.hbm_to_vmem [thread:$0]  %s15, 256, %s17, [#allocation3], 128, 128, 8
    $region5: #{tpu_custom_call.1} parent=1 // pred_fallthru
      _
    // Predicated region
    $region6: #{tpu_custom_call.1} parent=1 // pred_check
      _
    $region7: #{tpu_custom_call.1} parent=1 // pred_check_branch
      %24 = sbr.rel (0) target = $region9
    $region8: #{tpu_custom_call.1} parent=1 // pred_region
      %26 = vsyncadd [#allocation6], 0
      %s27 = sshll.u32 %s1, 4
      %s28 = int_to_ptr.hbm [resolvable:$true] %s27
      %s29 = sshll.u32 [#allocation5], 4
      %s30 = int_to_ptr.vmem [resolvable:$true] %s29
      %35 = dma.hbm_to_vmem [thread:$0]  %s28, 256, %s30, [#allocation6], 128, 128, 8
    $region9: #{tpu_custom_call.1} parent=1 // pred_fallthru
      _
    // Predicated region
    $region10: #{tpu_custom_call.1} parent=1 // pred_check
      _
    $region11: #{tpu_custom_call.1} parent=1 // pred_check_branch
      %37 = sbr.rel (0) target = $region13
    $region12: #{tpu_custom_call.1} parent=1 // pred_region
      %39 = dma.done [#allocation3], 256
    $region13: #{tpu_custom_call.1} parent=1 // pred_fallthru
      _
    // Predicated region
    $region14: #{tpu_custom_call.1} parent=1 // pred_check
      _
    $region15: #{tpu_custom_call.1} parent=1 // pred_check_branch
      %41 = sbr.rel (0) target = $region17
    $region16: #{tpu_custom_call.1} parent=1 // pred_region
      %43 = dma.done [#allocation6], 256
    $region17: #{tpu_custom_call.1} parent=1 // pred_fallthru
      _
    %v44 = vld [vmem:[#allocation2] sm:$0xff]
    %v45 = vld [vmem:[#allocation2 + $0x8] sm:$0xff]
    %v46 = vld [vmem:[#allocation5] sm:$0xff]
    %v47 = vld [vmem:[#allocation5 + $0x8] sm:$0xff]
    %v48 = vmul.f32 %v44, %v46
    %v49 = vmul.f32 %v45, %v47
    %50 = vst [vmem:[#allocation7] sm:$0xff] %v48
    %51 = vst [vmem:[#allocation7 + $0x8] sm:$0xff] %v49
    // Predicated region
    $region18: #{tpu_custom_call.1} parent=1 // pred_check
      _
    $region19: #{tpu_custom_call.1} parent=1 // pred_check_branch
      %53 = sbr.rel (0) target = $region21
    $region20: #{tpu_custom_call.1} parent=1 // pred_region
      %55 = vsyncadd [#allocation4], 0
      %s56 = sshll.u32 [#allocation7], 4
      %s57 = int_to_ptr.vmem [resolvable:$true] %s56
      %s58 = sshll.u32 %s2, 4
      %s59 = int_to_ptr.hbm [resolvable:$true] %s58
      %64 = dma.vmem_to_hbm [thread:$0]  %s57, 256, %s59, [#allocation4], 128, 128, 8
    $region21: #{tpu_custom_call.1} parent=1 // pred_fallthru
      _
    // Predicated region
    $region22: #{tpu_custom_call.1} parent=1 // pred_check
      _
    $region23: #{tpu_custom_call.1} parent=1 // pred_check_branch
      %66 = sbr.rel (0) target = $region25
    $region24: #{tpu_custom_call.1} parent=1 // pred_region
      %68 = dma.done [#allocation4], 256
    $region25: #{tpu_custom_call.1} parent=1 // pred_fallthru
      _
    %69 = vsyncpa [#allocation3], 1
    %70 = vsyncpa [#allocation6], 1
    %71 = vsyncpa [#allocation4], 1

</llo_original>
